<compile_context>
chip_gen: v6e
topology: v6e:2x2x1
jax: 0.10.0
libtpu: 0.0.40
codegen_flags: <defaults>
</compile_context>

<pallas_src>
import functools

import jax
import jax.numpy as jnp
from jax.experimental import pallas as pl
from jax.experimental.pallas import tpu as pltpu


def _round_up(x, m):
    return ((x + m - 1) // m) * m


def _gelu_tanh(x):
    # Exact formula used by torch.nn.functional.gelu(..., approximate='tanh').
    c = jnp.sqrt(jnp.float32(2.0 / jnp.pi))
    return 0.5 * x * (1.0 + jnp.tanh(c * (x + 0.044715 * x * x * x)))


def _vmem_capacity_bytes():
    try:
        return int(pltpu.get_tpu_info().vmem_capacity_bytes)
    except Exception:
        return 64 * 2**20  # conservative fallback (v7x per-TensorCore VMEM)


def _mlp_vmem_bytes(tm, ti, n_sub, H, compute_bpe, out_bpe):
    tc = max(ti // n_sub, 1)
    return (2 * tm * H * compute_bpe            # x tiles (double-buffered)
            + 2 * H * (2 * ti) * compute_bpe    # fused gate|up weight tiles
            + 2 * ti * H * compute_bpe          # down-proj weight tiles
            + 2 * tm * H * out_bpe              # output tiles
            + tm * H * 4                        # f32 accumulator scratch
            + 4 * tm * tc * 4)                  # per-sub-chunk f32 intermediates


def choose_mlp_tiling(T, H, I, compute_dtype=jnp.bfloat16, out_dtype=jnp.bfloat16):
    """Pick (tm, ti, n_sub) per TPU generation so the working set fits VMEM."""
    vmem_cap = _vmem_capacity_bytes()
    budget = int(0.80 * vmem_cap)
    if vmem_cap >= 96 * 2**20:
        # v5e / v6e: 128 MiB VMEM -> push arithmetic intensity (FLOP/weight-byte).
        tm_target, ti_target = 512, 512
    else:
        # v7x: 64 MiB VMEM, higher HBM BW -> already near compute-bound at smaller tm.
        tm_target, ti_target = 384, 512

    tm = min(tm_target, _round_up(T, 16))        # 16-sublane packing for bf16
    ti = I if I <= ti_target else ti_target      # ti_target is a multiple of 128

    cbpe = jnp.dtype(compute_dtype).itemsize
    obpe = jnp.dtype(out_dtype).itemsize

    def n_sub_for(t):
        return 2 if (t % 256 == 0) else 1

    # Shrink ti, then tm, until the estimated working set fits the budget.
    while (_mlp_vmem_bytes(tm, ti, n_sub_for(ti), H, cbpe, obpe) > budget
           and ti > 128 and ti % 256 == 0):
        ti //= 2
    while (_mlp_vmem_bytes(tm, ti, n_sub_for(ti), H, cbpe, obpe) > budget
           and tm > 128 and tm % 32 == 0):
        tm //= 2
    return tm, ti, n_sub_for(ti)


def prepare_gemma_mlp_weights(w_gate, w_up, w_down, *, ti, n_sub,
                              compute_dtype=jnp.bfloat16):
    """One-time weight prep (do this at weight-load time, NOT per forward).

    w_gate, w_up: [H, I]  (x @ W layout, i.e. transposed vs torch Linear)
    w_down:       [I, H]

    Returns:
      wgu: [H, 2*I_pad] bf16; gate/up fused along the lane dim, interleaved
           per sub-chunk of size tc=ti//n_sub:
           [gate_chunk_0 | up_chunk_0 | gate_chunk_1 | up_chunk_1 | ...]
      wd:  [I_pad, H] bf16 down-projection (natural row order).
    """
    H, I = w_gate.shape
    assert w_up.shape == (H, I) and w_down.shape == (I, H)
    tc = ti // n_sub
    I_pad = _round_up(I, ti)
    if I_pad != I:
        w_gate = jnp.pad(w_gate, ((0, 0), (0, I_pad - I)))
        w_up = jnp.pad(w_up, ((0, 0), (0, I_pad - I)))
        w_down = jnp.pad(w_down, ((0, I_pad - I), (0, 0)))
    n_chunks = I_pad // tc
    g = w_gate.reshape(H, n_chunks, tc)
    u = w_up.reshape(H, n_chunks, tc)
    wgu = jnp.stack([g, u], axis=2).reshape(H, 2 * I_pad).astype(compute_dtype)
    wd = w_down.astype(compute_dtype)
    return wgu, wd


def _gemma_mlp_kernel(x_ref, wgu_ref, wd_ref, o_ref, acc_ref, *, ti, n_sub):
    """One (token-tile, I-tile) grid step of the fused MLP.

    x_ref:   [tm, H]       bf16 token tile (resident across k)
    wgu_ref: [H, 2*ti]     fused gate|up weight tile (sub-chunk interleaved)
    wd_ref:  [ti, H]       down-projection weight tile
    o_ref:   [tm, H]       output tile (written on the last I-tile)
    acc_ref: [tm, H]       f32 accumulator (VMEM scratch, resident across k)
    """
    k = pl.program_id(1)

    @pl.when(k == 0)
    def _init():
        acc_ref[...] = jnp.zeros_like(acc_ref)

    x = x_ref[...]                       # [tm, H] bf16
    tc = ti // n_sub
    # Unrolled sub-chunks: the fused gate|up matmul of chunk j+1 overlaps the
    # VPU/EUP (gelu-tanh * up) work and the down-proj matmul of chunk j.
    for j in range(n_sub):
        y = jnp.dot(x, wgu_ref[:, j * 2 * tc:(j + 1) * 2 * tc],
                    preferred_element_type=jnp.float32)           # [tm, 2*tc] f32
        h = _gelu_tanh(y[:, :tc]) * y[:, tc:]                     # [tm, tc] f32
        acc_ref[...] += jnp.dot(h.astype(wd_ref.dtype),
                                wd_ref[j * tc:(j + 1) * tc, :],
                                preferred_element_type=jnp.float32)

    @pl.when(k == pl.num_programs(1) - 1)
    def _finalize():
        o_ref[...] = acc_ref[...].astype(o_ref.dtype)


def gemma_mlp_forward(hidden_states, wgu, wd, *, tm, ti, n_sub,
                      compute_dtype=jnp.bfloat16):
    """Fused Gemma MLP forward with pre-prepared weights.

    hidden_states: [B, S, H]
    wgu:           [H, 2*I_pad] from prepare_gemma_mlp_weights
    wd:            [I_pad, H]
    """
    B, S, H = hidden_states.shape
    I_pad = wgu.shape[1] // 2
    assert wgu.shape == (H, 2 * I_pad) and wd.shape == (I_pad, H)
    assert I_pad % ti == 0
    out_dtype = hidden_states.dtype
    T = B * S
    T_pad = _round_up(T, tm)

    # Per-forward path: only activations are padded / cast.
    x2d = hidden_states.reshape(T, H)
    if T_pad != T:
        x2d = jnp.pad(x2d, ((0, T_pad - T), (0, 0)))
    x2d = x2d.astype(compute_dtype)

    grid = (T_pad // tm, I_pad // ti)

    cbpe = jnp.dtype(compute_dtype).itemsize
    obpe = jnp.dtype(out_dtype).itemsize
    vmem_bytes = _mlp_vmem_bytes(tm, ti, n_sub, H, cbpe, obpe)
    vmem_cap = _vmem_capacity_bytes()
    vmem_limit = int(min(0.9 * vmem_cap, max(32 * 2**20, int(1.25 * vmem_bytes))))

    num_token_tiles = T_pad // tm
    cost = pl.CostEstimate(
        flops=6 * T_pad * H * I_pad,                       # three matmuls, 2*M*N*K each
        transcendentals=T_pad * I_pad,                     # tanh in GELU
        bytes_accessed=(T_pad * H * cbpe                   # activations in
                        + num_token_tiles * 3 * H * I_pad * cbpe  # weights re-streamed per token tile
                        + T_pad * H * obpe),               # output
    )

    kernel = functools.partial(_gemma_mlp_kernel, ti=ti, n_sub=n_sub)

    out2d = pl.pallas_call(
        kernel,
        out_shape=jax.ShapeDtypeStruct((T_pad, H), out_dtype),
        grid_spec=pltpu.PrefetchScalarGridSpec(
            num_scalar_prefetch=0,
            grid=grid,
            in_specs=[
                pl.BlockSpec((tm, H), lambda i, k: (i, 0)),          # token tile of x
                pl.BlockSpec((H, 2 * ti), lambda i, k: (0, k)),      # fused gate|up weight tile
                pl.BlockSpec((ti, H), lambda i, k: (k, 0)),          # down-proj weight tile
            ],
            out_specs=pl.BlockSpec((tm, H), lambda i, k: (i, 0)),
            scratch_shapes=[pltpu.VMEM((tm, H), jnp.float32)],
        ),
        compiler_params=pltpu.CompilerParams(
            dimension_semantics=("parallel", "arbitrary"),
            vmem_limit_bytes=vmem_limit,
        ),
        cost_estimate=cost,
    )(x2d, wgu, wd)

    return out2d[:T].reshape(B, S, H)


def gemma_mlp(hidden_states, w_gate, w_up, w_down, *, compute_dtype=jnp.bfloat16):
    """Convenience wrapper.  NOTE: in a real model, call choose_mlp_tiling and
    prepare_gemma_mlp_weights ONCE at weight-load time and reuse the results —
    re-stacking weights per call roughly doubles weight HBM traffic."""
    B, S, H = hidden_states.shape
    I = w_gate.shape[1]
    tm, ti, n_sub = choose_mlp_tiling(B * S, H, I, compute_dtype, hidden_states.dtype)
    wgu, wd = prepare_gemma_mlp_weights(w_gate, w_up, w_down, ti=ti, n_sub=n_sub,
                                        compute_dtype=compute_dtype)
    return gemma_mlp_forward(hidden_states, wgu, wd, tm=tm, ti=ti, n_sub=n_sub,
                             compute_dtype=compute_dtype)


if __name__ == "__main__":
    # Small config consistent with GemmaConfig(hidden_size=32, intermediate_size=64).
    batch, seq, hidden, intermediate = 2, 8, 32, 64

    key = jax.random.PRNGKey(0)
    k_x, k_g, k_u, k_d = jax.random.split(key, 4)

    x = jax.random.normal(k_x, (batch, seq, hidden), dtype=jnp.float32)
    # Deterministic "Linear" weights, stored as [in, out] for x @ W.
    w_gate = jax.random.normal(k_g, (hidden, intermediate), dtype=jnp.float32) * 0.05
    w_up = jax.random.normal(k_u, (hidden, intermediate), dtype=jnp.float32) * 0.05
    w_down = jax.random.normal(k_d, (intermediate, hidden), dtype=jnp.float32) * 0.05

    # 1) Per-generation tiling + weight preparation, done once (weight-load time).
    tm, ti, n_sub = choose_mlp_tiling(batch * seq, hidden, intermediate,
                                      jnp.bfloat16, x.dtype)
    wgu, wd = prepare_gemma_mlp_weights(w_gate, w_up, w_down, ti=ti, n_sub=n_sub)

    # 2) Per-forward path touches only activations.
    out = gemma_mlp_forward(x, wgu, wd, tm=tm, ti=ti, n_sub=n_sub)
    out = jax.block_until_ready(out)

    # Pure-JAX f32 reference (same math as the PyTorch forward). The kernel uses
    # bf16 MXU operands with f32 accumulation, so tolerances are set accordingly.
    gate_ref = jax.nn.gelu(x @ w_gate, approximate=True)
    ref = (gate_ref * (x @ w_up)) @ w_down
    assert out.shape == (batch, seq, hidden)
    assert jnp.allclose(out, ref, atol=2e-2, rtol=2e-2), "mismatch vs reference"

    print("KERNEL_OK")
</pallas_src>

<mosaic_0001>
module attributes {stable_mosaic.version = 11 : i64} {
  func.func @_gemma_mlp_kernel(%arg0: i32, %arg1: i32, %arg2: memref<16x32xbf16, #tpu.memory_space<vmem>>, %arg3: memref<32x128xbf16, #tpu.memory_space<vmem>>, %arg4: memref<64x32xbf16, #tpu.memory_space<vmem>>, %arg5: memref<16x32xf32, #tpu.memory_space<vmem>>, %arg6: memref<16x32xf32, #tpu.memory_space<vmem>>) attributes {dimension_semantics = [#tpu.dimension_semantics<parallel>, #tpu.dimension_semantics<arbitrary>], iteration_bounds = array<i64: 1, 1>, scalar_prefetch = 0 : i64, scratch_operands = 1 : i64, tpu.core_type = #tpu.core_type<tc>, window_params = [{transform_indices = @transform_0, window_bounds = array<i64: 16, 32>}, {transform_indices = @transform_1, window_bounds = array<i64: 32, 128>}, {transform_indices = @transform_2, window_bounds = array<i64: 64, 32>}, {transform_indices = @transform_3, window_bounds = array<i64: 16, 32>}]} {
    %c0_i32 = arith.constant 0 : i32
    %0 = arith.cmpi eq, %arg1, %c0_i32 : i32
    %1 = arith.extui %0 : i1 to i32
    %c0_i32_0 = arith.constant 0 : i32
    %2 = arith.cmpi ne, %1, %c0_i32_0 : i32
    scf.if %2 {
      %cst_17 = arith.constant 0.000000e+00 : f32
      %32 = vector.broadcast %cst_17 : f32 to vector<16x32xf32>
      %c0_18 = arith.constant 0 : index
      %c0_19 = arith.constant 0 : index
      %33 = vector.load %arg6[%c0_18, %c0_19] : memref<16x32xf32, #tpu.memory_space<vmem>>, vector<16x32xf32>
      tpu.vector_store %arg6[%c0_18, %c0_19], %32 {strides = array<i32>} : memref<16x32xf32, #tpu.memory_space<vmem>>, vector<16x32xf32>,
    } else {
    }
    %c0 = arith.constant 0 : index
    %c0_1 = arith.constant 0 : index
    %3 = vector.load %arg2[%c0, %c0_1] : memref<16x32xbf16, #tpu.memory_space<vmem>>, vector<16x32xbf16>
    %c0_2 = arith.constant 0 : index
    %c0_3 = arith.constant 0 : index
    %4 = vector.load %arg3[%c0_2, %c0_3] : memref<32x128xbf16, #tpu.memory_space<vmem>>, vector<32x128xbf16>
    %cst = arith.constant dense<0.000000e+00> : vector<16x128xf32>
    %5 = tpu.matmul %3, %4, %cst {dimension_numbers = #tpu.dot_dimension_numbers<[1], [0], [0], [1], [0, 0, 1, 1], [], []>} : vector<16x32xbf16>, vector<32x128xbf16>, vector<16x128xf32> -> vector<16x128xf32>
    %6 = vector.extract_strided_slice %5 {offsets = [0, 0], sizes = [16, 64], strides = [1, 1]} : vector<16x128xf32> to vector<16x64xf32>
    %cst_4 = arith.constant 0.636619746 : f32
    %7 = math.sqrt %cst_4 : f32
    %cst_5 = arith.constant 5.000000e-01 : f32
    %8 = vector.broadcast %cst_5 : f32 to vector<16x64xf32>
    %9 = arith.mulf %8, %6 : vector<16x64xf32>
    %cst_6 = arith.constant 4.471500e-02 : f32
    %10 = vector.broadcast %cst_6 : f32 to vector<16x64xf32>
    %11 = arith.mulf %10, %6 : vector<16x64xf32>
    %12 = arith.mulf %11, %6 : vector<16x64xf32>
    %13 = arith.mulf %12, %6 : vector<16x64xf32>
    %14 = arith.addf %6, %13 : vector<16x64xf32>
    %15 = vector.broadcast %7 : f32 to vector<16x64xf32>
    %16 = arith.mulf %15, %14 : vector<16x64xf32>
    %17 = math.tanh %16 : vector<16x64xf32>
    %cst_7 = arith.constant 1.000000e+00 : f32
    %18 = vector.broadcast %cst_7 : f32 to vector<16x64xf32>
    %19 = arith.addf %18, %17 : vector<16x64xf32>
    %20 = arith.mulf %9, %19 : vector<16x64xf32>
    %21 = vector.extract_strided_slice %5 {offsets = [0, 64], sizes = [16, 64], strides = [1, 1]} : vector<16x128xf32> to vector<16x64xf32>
    %22 = arith.mulf %20, %21 : vector<16x64xf32>
    %c0_8 = arith.constant 0 : index
    %c0_9 = arith.constant 0 : index
    %23 = vector.load %arg6[%c0_8, %c0_9] : memref<16x32xf32, #tpu.memory_space<vmem>>, vector<16x32xf32>
    %24 = arith.truncf %22 : vector<16x64xf32> to vector<16x64xbf16>
    %c0_10 = arith.constant 0 : index
    %c0_11 = arith.constant 0 : index
    %25 = vector.load %arg4[%c0_10, %c0_11] : memref<64x32xbf16, #tpu.memory_space<vmem>>, vector<64x32xbf16>
    %cst_12 = arith.constant dense<0.000000e+00> : vector<16x32xf32>
    %26 = tpu.matmul %24, %25, %cst_12 {dimension_numbers = #tpu.dot_dimension_numbers<[1], [0], [0], [1], [0, 0, 1, 1], [], []>} : vector<16x64xbf16>, vector<64x32xbf16>, vector<16x32xf32> -> vector<16x32xf32>
    %27 = arith.addf %23, %26 : vector<16x32xf32>
    %c0_13 = arith.constant 0 : index
    %c0_14 = arith.constant 0 : index
    %28 = vector.load %arg6[%c0_13, %c0_14] : memref<16x32xf32, #tpu.memory_space<vmem>>, vector<16x32xf32>
    tpu.vector_store %arg6[%c0_13, %c0_14], %27 {strides = array<i32>} : memref<16x32xf32, #tpu.memory_space<vmem>>, vector<16x32xf32>,
    %c0_i32_15 = arith.constant 0 : i32
    %29 = arith.cmpi eq, %arg1, %c0_i32_15 : i32
    %30 = arith.extui %29 : i1 to i32
    %c0_i32_16 = arith.constant 0 : i32
    %31 = arith.cmpi ne, %30, %c0_i32_16 : i32
    scf.if %31 {
      %c0_17 = arith.constant 0 : index
      %c0_18 = arith.constant 0 : index
      %32 = vector.load %arg6[%c0_17, %c0_18] : memref<16x32xf32, #tpu.memory_space<vmem>>, vector<16x32xf32>
      %c0_19 = arith.constant 0 : index
      %c0_20 = arith.constant 0 : index
      %33 = vector.load %arg5[%c0_19, %c0_20] : memref<16x32xf32, #tpu.memory_space<vmem>>, vector<16x32xf32>
      tpu.vector_store %arg5[%c0_19, %c0_20], %32 {strides = array<i32>} : memref<16x32xf32, #tpu.memory_space<vmem>>, vector<16x32xf32>,
    } else {
    }
    return
  }
  func.func @transform_0(%arg0: i32, %arg1: i32) -> (i32, i32) {
    %c0_i32 = arith.constant 0 : i32
    %c0_i32_0 = arith.constant 0 : i32
    return %arg0, %c0_i32 : i32, i32
  }
  func.func @transform_1(%arg0: i32, %arg1: i32) -> (i32, i32) {
    %c0_i32 = arith.constant 0 : i32
    %c0_i32_0 = arith.constant 0 : i32
    return %c0_i32, %arg1 : i32, i32
  }
  func.func @transform_2(%arg0: i32, %arg1: i32) -> (i32, i32) {
    %c0_i32 = arith.constant 0 : i32
    %c0_i32_0 = arith.constant 0 : i32
    return %arg1, %c0_i32 : i32, i32
  }
  func.func @transform_3(%arg0: i32, %arg1: i32) -> (i32, i32) {
    %c0_i32 = arith.constant 0 : i32
    %c0_i32_0 = arith.constant 0 : i32
    return %arg0, %c0_i32 : i32, i32
  }
}

</mosaic_0001>

<llo_original>
// kernel: tpu_custom_call.1
$region0: #{tpu_custom_call.1}
  #allocation0 [shape = 'u32[]', space=smem, size = 0x4, offset = 0x4, fixed_abs, tag = 'smem constant byte address 0x4 - core index']
  #allocation1 [shape = 'u32[144,128]{1,0:T(1,128)}', space=vmem, size = 0x12000, scoped, tag = 'internal scratch']
  #allocation2 [shape = 'f32[16,32]{1,0:T(8,128)}', space=vmem, size = 0x2000, scoped, tag = 'scratch operand']
  %s0 = inlined_call_operand.vmem [shape: bf16[16,32], index: 0, kind: input, shape index: {}]
  %s1 = inlined_call_operand.vmem [shape: bf16[32,128], index: 1, kind: input, shape index: {}]
  %s2 = inlined_call_operand.vmem [shape: bf16[64,32], index: 2, kind: input, shape index: {}]
  %s3 = inlined_call_operand.hbm [shape: f32[16,32], index: 3, kind: output, shape index: {}]
  %s4 = sld [smem:[#allocation0]]
  $region30: #{tpu_custom_call.1} parent=0
    _
  %s6 = ssub.s32 1, %s4
  %s7 = scalar_select 0, %s6, %s4
  $region1: #{tpu_custom_call.1} parent=0
    #allocation3 [shape = 'u8[8192]{0}', space=vmem, size = 0x2000, scoped, tag = 'output window, operand 0, single buffered']
    #allocation4 [shape = 's32[1]{0}', space=sflag, size = 0x4, scoped, tag = 'scoped memory for tpu_custom_call.1']
    %8 = vsyncpa [#allocation4], 0
    // Predicated region
    $region2: #{tpu_custom_call.1} parent=1 // pred_check
      _
    $region3: #{tpu_custom_call.1} parent=1 // pred_check_branch
      %10 = sbr.rel (0) target = $region5
    $region4: #{tpu_custom_call.1} parent=1 // pred_region
      _
    $region5: #{tpu_custom_call.1} parent=1 // pred_fallthru
      _
    // Predicated region
    $region6: #{tpu_custom_call.1} parent=1 // pred_check
      _
    $region7: #{tpu_custom_call.1} parent=1 // pred_check_branch
      %12 = sbr.rel (0) target = $region9
    $region8: #{tpu_custom_call.1} parent=1 // pred_region
      _
    $region9: #{tpu_custom_call.1} parent=1 // pred_fallthru
      _
    // Predicated region
    $region10: #{tpu_custom_call.1} parent=1 // pred_check
      _
    $region11: #{tpu_custom_call.1} parent=1 // pred_check_branch
      %14 = sbr.rel (0) target = $region13
    $region12: #{tpu_custom_call.1} parent=1 // pred_region
      _
    $region13: #{tpu_custom_call.1} parent=1 // pred_fallthru
      _
    %p16 = scmp.eq.s32.totalorder 0, 0
    // Predicated region
    $region14: #{tpu_custom_call.1} parent=1 // pred_check
      %p17 = pneg %p16
    $region15: #{tpu_custom_call.1} parent=1 // pred_check_branch
      %19 = sbr.rel (%p17) target = $region17
    $region16: #{tpu_custom_call.1} parent=1 // pred_region
      %vm20 = vcmask 261120
      %21 = vst.msk [vmem:[#allocation2] sm:$0xff] %vm20, 0.0
      %22 = vst.msk [vmem:[#allocation2 + $0x8] sm:$0xff] %vm20, 0.0
    $region17: #{tpu_custom_call.1} parent=1 // pred_fallthru
      _
    %v23 = vld [vmem:[%s0] sm:$0xf]
    %v24 = vld [vmem:[%s0 + $0x4] sm:$0xf]
    %v25 = vld [vmem:[%s1] sm:$0xf]
    %v26 = vld [vmem:[%s1 + $0x4] sm:$0xf]
    %v27 = vld [vmem:[%s1 + $0x8] sm:$0xf]
    %v28 = vld [vmem:[%s1 + $0xc] sm:$0xf]
    %v31 = vunpack.c.l.b16 %v23
    %v32 = vunpack.c.l.b16 %v24
    %v33 = vpack.c.b16 %v32, %v31
    %v38 = vunpack.c.l.b16 %v25
    %v39 = vunpack.c.l.b16 %v26
    %v40 = vunpack.c.l.b16 %v27
    %v41 = vunpack.c.l.b16 %v28
    %v42 = vpack.c.b16 %v39, %v38
    %v43 = vpack.c.b16 %v41, %v40
    %vm46 = vcmask 261120
    %v48 = vsel %vm46, %v33, 0
    %50 = vmatprep.subr.bf16.mxu0 0
    %51 = vmatpush1.bf16.msra.mxu0 0
    %52 = vmatprep.subr.bf16.mxu0 0
    %53 = vmatpush1.bf16.msra.mxu0 0
    %54 = vmatprep.subr.bf16.mxu0 0
    %55 = vmatpush1.bf16.msra.mxu0 0
    %56 = vmatprep.subr.bf16.mxu0 0
    %57 = vmatpush1.bf16.msra.mxu0 0
    %58 = vmatprep.subr.bf16.mxu0 0
    %59 = vmatpush1.bf16.msra.mxu0 0
    %60 = vmatprep.subr.bf16.mxu0 0
    %61 = vmatpush1.bf16.msra.mxu0 0
    %62 = vmatprep.subr.bf16.mxu0 0
    %63 = vmatpush1.bf16.msra.mxu0 %v43
    %64 = vmatprep.subr.bf16.mxu0 0
    %65 = vmatpush1.bf16.msra.mxu0 %v42
    %66 = vmatprep.subr.bf16.mxu0 0
    %67 = vmatpush2.bf16.msra.mxu0 0
    %68 = vmatprep.subr.bf16.mxu0 0
    %69 = vmatpush2.bf16.msra.mxu0 0
    %70 = vmatprep.subr.bf16.mxu0 0
    %71 = vmatpush2.bf16.msra.mxu0 0
    %72 = vmatprep.subr.bf16.mxu0 0
    %73 = vmatpush2.bf16.msra.mxu0 0
    %74 = vmatprep.subr.bf16.mxu0 0
    %75 = vmatpush2.bf16.msra.mxu0 0
    %76 = vmatprep.subr.bf16.mxu0 0
    %77 = vmatpush2.bf16.msra.mxu0 0
    %78 = vmatprep.subr.bf16.mxu0 0
    %79 = vmatpush2.bf16.msra.mxu0 0
    %80 = vmatprep.subr.bf16.mxu0 0
    %81 = vmatpush2.bf16.msra.mxu0 0
    %82 = vmatprep.mubr.bf16.mxu0 0
    %83 = vmatmul.mubr.bf16.gmra.mxu0 %v48
    %v84 = vpop.f32.mrf.mxu0
    %v85 = vadd.f32 0.0, %v84
    %v86 = vpop.f32.mrf.mxu0
    %v87 = vpop.f32.mrf.mxu0
    %v88 = vadd.f32 0.0, %v87
    %v89 = vpop.f32.mrf.mxu0
    %90 = vdwg.mxu0
    %v91 = vmul.f32 %v85, 0.5
    %v92 = vmul.f32 %v88, 0.5
    %v93 = vmul.f32 %v85, 0.044715
    %v94 = vmul.f32 %v88, 0.044715
    %v95 = vmul.f32 %v93, %v85
    %v96 = vmul.f32 %v94, %v88
    %v97 = vmul.f32 %v95, %v85
    %v98 = vmul.f32 %v96, %v88
    %v99 = vadd.f32 %v85, %v97
    %v100 = vadd.f32 %v88, %v98
    %v101 = vmul.f32 %v99, 0.7978845
    %v102 = vmul.f32 %v100, 0.7978845
    %v103 = vtanh.pop %v101
    %v104 = vtanh.pop %v102
    %v105 = vadd.f32 %v103, 1.0
    %v106 = vadd.f32 %v104, 1.0
    %v107 = vmul.f32 %v91, %v105
    %v108 = vmul.f32 %v92, %v106
    %111 = vrot.lane.b32.xlu0 %v85, 64
    %v112 = vpop.permute.xlu0 %111
    %113 = vrot.lane.b32.xlu0 %v88, 64
    %v114 = vpop.permute.xlu0 %113
    %v117 = vmul.f32 %v107, %v112
    %v118 = vmul.f32 %v108, %v114
    %v119 = vld [vmem:[#allocation2] sm:$0xff]
    %v120 = vld [vmem:[#allocation2 + $0x8] sm:$0xff]
    %v121 = vpack.c.bf16 %v118, %v117
    %v122 = vld [vmem:[%s2] sm:$0xf]
    %v123 = vld [vmem:[%s2 + $0x4] sm:$0xf]
    %v124 = vld [vmem:[%s2 + $0x8] sm:$0xf]
    %v125 = vld [vmem:[%s2 + $0xc] sm:$0xf]
    %v126 = vld [vmem:[%s2 + $0x10] sm:$0xf]
    %v127 = vld [vmem:[%s2 + $0x14] sm:$0xf]
    %v128 = vld [vmem:[%s2 + $0x18] sm:$0xf]
    %v129 = vld [vmem:[%s2 + $0x1c] sm:$0xf]
    %v138 = vunpack.c.l.b16 %v122
    %v139 = vunpack.c.l.b16 %v123
    %v140 = vunpack.c.l.b16 %v124
    %v141 = vunpack.c.l.b16 %v125
    %v142 = vunpack.c.l.b16 %v126
    %v143 = vunpack.c.l.b16 %v127
    %v144 = vunpack.c.l.b16 %v128
    %v145 = vunpack.c.l.b16 %v129
    %v146 = vpack.c.b16 %v139, %v138
    %v147 = vpack.c.b16 %v141, %v140
    %v148 = vpack.c.b16 %v143, %v142
    %v149 = vpack.c.b16 %v145, %v144
    %vm154 = vcmask 523264
    %v156 = vsel %vm154, %v121, 0
    %158 = vmatprep.subr.bf16.mxu0 0
    %159 = vmatpush1.bf16.msra.mxu0 0
    %160 = vmatprep.subr.bf16.mxu0 0
    %161 = vmatpush1.bf16.msra.mxu0 0
    %162 = vmatprep.subr.bf16.mxu0 0
    %163 = vmatpush1.bf16.msra.mxu0 0
    %164 = vmatprep.subr.bf16.mxu0 0
    %165 = vmatpush1.bf16.msra.mxu0 0
    %166 = vmatprep.subr.bf16.mxu0 0
    %167 = vmatpush1.bf16.msra.mxu0 %v149
    %168 = vmatprep.subr.bf16.mxu0 0
    %169 = vmatpush1.bf16.msra.mxu0 %v148
    %170 = vmatprep.subr.bf16.mxu0 0
    %171 = vmatpush1.bf16.msra.mxu0 %v147
    %172 = vmatprep.subr.bf16.mxu0 0
    %173 = vmatpush1.bf16.msra.mxu0 %v146
    %174 = vmatprep.subr.bf16.mxu0 0
    %175 = vmatpush2.bf16.msra.mxu0 0
    %176 = vmatprep.subr.bf16.mxu0 0
    %177 = vmatpush2.bf16.msra.mxu0 0
    %178 = vmatprep.subr.bf16.mxu0 0
    %179 = vmatpush2.bf16.msra.mxu0 0
    %180 = vmatprep.subr.bf16.mxu0 0
    %181 = vmatpush2.bf16.msra.mxu0 0
    %182 = vmatprep.subr.bf16.mxu0 0
    %183 = vmatpush2.bf16.msra.mxu0 0
    %184 = vmatprep.subr.bf16.mxu0 0
    %185 = vmatpush2.bf16.msra.mxu0 0
    %186 = vmatprep.subr.bf16.mxu0 0
    %187 = vmatpush2.bf16.msra.mxu0 0
    %188 = vmatprep.subr.bf16.mxu0 0
    %189 = vmatpush2.bf16.msra.mxu0 0
    %190 = vmatprep.mubr.bf16.mxu0 0
    %191 = vmatmul.mubr.bf16.gmra.mxu0 %v156
    %v192 = vpop.f32.mrf.mxu0
    %v193 = vadd.f32 0.0, %v192
    %v194 = vpop.f32.mrf.mxu0
    %v195 = vpop.f32.mrf.mxu0
    %v196 = vadd.f32 0.0, %v195
    %v197 = vpop.f32.mrf.mxu0
    %198 = vdwg.mxu0
    %v199 = vadd.f32 %v119, %v193
    %v200 = vadd.f32 %v120, %v196
    %201 = vst.msk [vmem:[#allocation2] sm:$0xff] %vm46, %v199
    %202 = vst.msk [vmem:[#allocation2 + $0x8] sm:$0xff] %vm46, %v200
    // Predicated region
    $region18: #{tpu_custom_call.1} parent=1 // pred_check
      %p203 = pneg %p16
    $region19: #{tpu_custom_call.1} parent=1 // pred_check_branch
      %205 = sbr.rel (%p203) target = $region21
    $region20: #{tpu_custom_call.1} parent=1 // pred_region
      %v206 = vld [vmem:[#allocation2] sm:$0xff]
      %v207 = vld [vmem:[#allocation2 + $0x8] sm:$0xff]
      %208 = vst.msk [vmem:[#allocation3] sm:$0xff] %vm46, %v206
      %209 = vst.msk [vmem:[#allocation3 + $0x8] sm:$0xff] %vm46, %v207
    $region21: #{tpu_custom_call.1} parent=1 // pred_fallthru
      _
    // Predicated region
    $region22: #{tpu_custom_call.1} parent=1 // pred_check
      _
    $region23: #{tpu_custom_call.1} parent=1 // pred_check_branch
      %211 = sbr.rel (0) target = $region25
    $region24: #{tpu_custom_call.1} parent=1 // pred_region
      %s213 = ssub.s32 256, 256
      %214 = vsyncadd [#allocation4], %s213
      %s215 = sshll.u32 [#allocation3], 4
      %s216 = int_to_ptr.vmem [resolvable:$true] %s215
      %221 = dma.vmem_to_hbm [thread:$0]  %s216, 256, %s3, [#allocation4], 128, 128, 8
    $region25: #{tpu_custom_call.1} parent=1 // pred_fallthru
      _
    // Predicated region
    $region26: #{tpu_custom_call.1} parent=1 // pred_check
      _
    $region27: #{tpu_custom_call.1} parent=1 // pred_check_branch
      %223 = sbr.rel (0) target = $region29
    $region28: #{tpu_custom_call.1} parent=1 // pred_region
      %224 = dma.done [#allocation4], 256
    $region29: #{tpu_custom_call.1} parent=1 // pred_fallthru
      _
    %225 = vsyncpa [#allocation4], 1

</llo_original>
